<compile_context>
chip_gen: v7x
topology: tpu7x:2x2x1
jax: 0.10.0
libtpu: 0.0.40
codegen_flags: <defaults>
</compile_context>

<pallas_src>
import functools

import numpy as np
import jax
import jax.numpy as jnp
from jax.experimental import pallas as pl
from jax.experimental.pallas import tpu as pltpu


def _conv3x3_bn(pad_ref, col_ref, w_ref, b_ref, *, W, HW, PAD, m_left, m_right):
    """Fused 3x3 conv (stride 1, zero pad 1) + folded-BN bias, flat-spatial layout.

    pad_ref: (Cin, HW + 2*PAD) zero-haloed activations; interior at [PAD, PAD+HW)
    col_ref: (>=9*Cin, HW) im2col scratch (rows are tap-major, cin-minor)
    w_ref:   (Cout, 9*Cin)  BN-scale-folded weights, column = (3*(dy+1)+(dx+1))*Cin + cin
    b_ref:   (Cout, 1)      folded BN bias
    returns  (Cout, HW) float32
    """
    cin = pad_ref.shape[0]
    tap = 0
    for dy in (-1, 0, 1):
        for dx in (-1, 0, 1):
            start = PAD + dy * W + dx                  # static lane offset
            xs = pad_ref[:, start:start + HW]          # (Cin, HW) shifted window
            # Column-wrap masking: a flat shift crosses row boundaries; zero the
            # contributions that would read a neighbouring row's edge column.
            if dx == -1:
                xs = xs * m_left                       # invalid where out-col == 0
            elif dx == 1:
                xs = xs * m_right                      # invalid where out-col == W-1
            col_ref[tap * cin:(tap + 1) * cin, :] = xs
            tap += 1
    # Single MXU contraction with K = 9*Cin (instead of 9 tiny K=Cin matmuls).
    y = jnp.dot(w_ref[...], col_ref[0:9 * cin, :],
                preferred_element_type=jnp.float32)    # (Cout, HW)
    return y + b_ref[...]                              # lane-broadcast bias


def basic_block_kernel(x_ref, m_ref, w1_ref, b1_ref, w2_ref, b2_ref, o_ref,
                       xpad_ref, ypad_ref, col_ref, *, W, PAD):
    HW = x_ref.shape[-1]
    m_left = m_ref[0:1, :]      # 0.0 where output column == 0      (dx == -1 taps)
    m_right = m_ref[1:2, :]     # 0.0 where output column == W - 1  (dx == +1 taps)

    # Zero only the halo strips (interiors are fully overwritten every step).
    zx = jnp.zeros((xpad_ref.shape[0], PAD), xpad_ref.dtype)
    xpad_ref[:, 0:PAD] = zx
    xpad_ref[:, PAD + HW:] = zx
    zy = jnp.zeros((ypad_ref.shape[0], PAD), ypad_ref.dtype)
    ypad_ref[:, 0:PAD] = zy
    ypad_ref[:, PAD + HW:] = zy

    # Stage 1: y1 = ReLU(BN1(conv1(x)))  -- intermediate stays entirely in VMEM.
    xpad_ref[:, PAD:PAD + HW] = x_ref[0]
    y1 = _conv3x3_bn(xpad_ref, col_ref, w1_ref, b1_ref,
                     W=W, HW=HW, PAD=PAD, m_left=m_left, m_right=m_right)
    ypad_ref[:, PAD:PAD + HW] = jnp.maximum(y1, 0.0)

    # Stage 2: out = ReLU(BN2(conv2(y1)) + x)   (identity shortcut)
    y2 = _conv3x3_bn(ypad_ref, col_ref, w2_ref, b2_ref,
                     W=W, HW=HW, PAD=PAD, m_left=m_left, m_right=m_right)
    o_ref[0] = jnp.maximum(y2 + x_ref[0], 0.0).astype(o_ref.dtype)


def _fold_bn_into_conv(w_oihw, gamma, beta, mean, var, eps=1e-5):
    """Eval-mode BN folded into conv weights: scale*conv(w,x) == conv(scale*w, x)."""
    scale = gamma / jnp.sqrt(var + eps)                        # (Cout,)
    cout, cin = w_oihw.shape[0], w_oihw.shape[1]
    # OIHW -> (Cout, ky, kx, Cin) -> (Cout, 9*Cin), column = tap*Cin + cin
    w_taps = jnp.transpose(w_oihw, (0, 2, 3, 1)).reshape(cout, 9 * cin)
    w_folded = w_taps * scale[:, None]
    bias = (beta - mean * scale)[:, None]                      # (Cout, 1)
    return w_folded, bias


@jax.jit
def basic_block_forward(x_nchw, params):
    """BasicBlock(in_planes=planes, stride=1, down_sample=None) forward, NCHW in/out."""
    N, C, H, W = x_nchw.shape
    HW = H * W
    PAD = ((W + 1 + 127) // 128) * 128   # >= W+1 and lane-aligned interior offset

    w1, b1 = _fold_bn_into_conv(params["w1"], params["g1"], params["be1"],
                                params["m1"], params["v1"])
    w2, b2 = _fold_bn_into_conv(params["w2"], params["g2"], params["be2"],
                                params["m2"], params["v2"])
    Cout = w2.shape[0]
    assert Cout == C, "identity shortcut requires in_planes == planes"

    # Static column-validity masks for the flat-spatial tap shifts (baked constants).
    cols = np.arange(HW) % W
    masks = jnp.asarray(np.stack([cols > 0, cols < W - 1]).astype(np.float32))  # (2, HW)

    # NCHW with spatial flattened into lanes: a free, contiguous reshape (no transpose).
    x_flat = x_nchw.reshape(N, C, HW)

    out_flat = pl.pallas_call(
        functools.partial(basic_block_kernel, W=W, PAD=PAD),
        out_shape=jax.ShapeDtypeStruct((N, Cout, HW), jnp.float32),
        grid_spec=pltpu.PrefetchScalarGridSpec(
            num_scalar_prefetch=0,
            grid=(N,),
            in_specs=[
                pl.BlockSpec((1, C, HW), lambda n: (n, 0, 0)),       # x (lane-dense)
                pl.BlockSpec((2, HW), lambda n: (0, 0)),             # column masks
                pl.BlockSpec((Cout, 9 * C), lambda n: (0, 0)),       # w1 (BN1 folded)
                pl.BlockSpec((Cout, 1), lambda n: (0, 0)),           # b1
                pl.BlockSpec((Cout, 9 * Cout), lambda n: (0, 0)),    # w2 (BN2 folded)
                pl.BlockSpec((Cout, 1), lambda n: (0, 0)),           # b2
            ],
            out_specs=pl.BlockSpec((1, Cout, HW), lambda n: (n, 0, 0)),
            scratch_shapes=[
                pltpu.VMEM((C, HW + 2 * PAD), jnp.float32),          # zero-haloed x
                pltpu.VMEM((Cout, HW + 2 * PAD), jnp.float32),       # zero-haloed y1
                pltpu.VMEM((9 * C, HW), jnp.float32),                # im2col matrix
            ],
        ),
        compiler_params=pltpu.CompilerParams(
            dimension_semantics=("parallel",),
            vmem_limit_bytes=32 * 1024 * 1024,
        ),
    )(x_flat, masks, w1, b1, w2, b2)

    return out_flat.reshape(N, Cout, H, W)


def _reference(x_nchw, params, eps=1e-5):
    """Plain-JAX reference for verification."""
    def conv(x, w):
        return jax.lax.conv_general_dilated(
            x, w, window_strides=(1, 1), padding=((1, 1), (1, 1)),
            dimension_numbers=("NCHW", "OIHW", "NCHW"))

    def bn(x, g, b, m, v):
        g, b, m, v = (a[None, :, None, None] for a in (g, b, m, v))
        return g * (x - m) / jnp.sqrt(v + eps) + b

    y = jax.nn.relu(bn(conv(x_nchw, params["w1"]),
                       params["g1"], params["be1"], params["m1"], params["v1"]))
    y = bn(conv(y, params["w2"]),
           params["g2"], params["be2"], params["m2"], params["v2"])
    return jax.nn.relu(y + x_nchw)


if __name__ == "__main__":
    key = jax.random.PRNGKey(0)
    N, C, H, W = 2, 4, 16, 16          # in_planes = planes = 4, stride = 1
    ks = jax.random.split(key, 11)

    x = jax.random.normal(ks[0], (N, C, H, W), dtype=jnp.float32)
    params = {
        "w1": jax.random.normal(ks[1], (C, C, 3, 3), jnp.float32) * 0.2,
        "w2": jax.random.normal(ks[2], (C, C, 3, 3), jnp.float32) * 0.2,
        "g1": jax.random.normal(ks[3], (C,), jnp.float32) * 0.1 + 1.0,
        "be1": jax.random.normal(ks[4], (C,), jnp.float32) * 0.1,
        "m1": jax.random.normal(ks[5], (C,), jnp.float32) * 0.1,
        "v1": jnp.abs(jax.random.normal(ks[6], (C,), jnp.float32)) * 0.1 + 0.5,
        "g2": jax.random.normal(ks[7], (C,), jnp.float32) * 0.1 + 1.0,
        "be2": jax.random.normal(ks[8], (C,), jnp.float32) * 0.1,
        "m2": jax.random.normal(ks[9], (C,), jnp.float32) * 0.1,
        "v2": jnp.abs(jax.random.normal(ks[10], (C,), jnp.float32)) * 0.1 + 0.5,
    }

    out = jax.block_until_ready(basic_block_forward(x, params))

    ref = _reference(x, params)
    assert out.shape == (N, C, H, W)
    assert jnp.allclose(out, ref, atol=2e-4, rtol=2e-4), "mismatch vs reference"
    print("KERNEL_OK")
</pallas_src>

<mosaic_0001>
module attributes {stable_mosaic.version = 11 : i64} {
  func.func @basic_block_kernel(%arg0: i32, %arg1: memref<1x4x256xf32, #tpu.memory_space<vmem>>, %arg2: memref<2x256xf32, #tpu.memory_space<vmem>>, %arg3: memref<4x36xf32, #tpu.memory_space<vmem>>, %arg4: memref<4x1xf32, #tpu.memory_space<vmem>>, %arg5: memref<4x36xf32, #tpu.memory_space<vmem>>, %arg6: memref<4x1xf32, #tpu.memory_space<vmem>>, %arg7: memref<1x4x256xf32, #tpu.memory_space<vmem>>, %arg8: memref<4x512xf32, #tpu.memory_space<vmem>>, %arg9: memref<4x512xf32, #tpu.memory_space<vmem>>, %arg10: memref<36x256xf32, #tpu.memory_space<vmem>>) attributes {dimension_semantics = [#tpu.dimension_semantics<parallel>], iteration_bounds = array<i64: 2>, scalar_prefetch = 0 : i64, scratch_operands = 3 : i64, tpu.core_type = #tpu.core_type<tc>, window_params = [{transform_indices = @transform_0, window_bounds = array<i64: 1, 4, 256>}, {pipeline_mode = #tpu.pipeline_mode<synchronous>, transform_indices = @transform_1, window_bounds = array<i64: 2, 256>}, {pipeline_mode = #tpu.pipeline_mode<synchronous>, transform_indices = @transform_2, window_bounds = array<i64: 4, 36>}, {pipeline_mode = #tpu.pipeline_mode<synchronous>, transform_indices = @transform_3, window_bounds = array<i64: 4, 1>}, {pipeline_mode = #tpu.pipeline_mode<synchronous>, transform_indices = @transform_4, window_bounds = array<i64: 4, 36>}, {pipeline_mode = #tpu.pipeline_mode<synchronous>, transform_indices = @transform_5, window_bounds = array<i64: 4, 1>}, {transform_indices = @transform_6, window_bounds = array<i64: 1, 4, 256>}]} {
    %c0 = arith.constant 0 : index
    %c0_0 = arith.constant 0 : index
    %0 = vector.load %arg2[%c0, %c0_0] : memref<2x256xf32, #tpu.memory_space<vmem>>, vector<1x256xf32>
    %c1 = arith.constant 1 : index
    %c0_1 = arith.constant 0 : index
    %1 = vector.load %arg2[%c1, %c0_1] : memref<2x256xf32, #tpu.memory_space<vmem>>, vector<1x256xf32>
    %cst = arith.constant 0.000000e+00 : f32
    %2 = vector.broadcast %cst : f32 to vector<4x128xf32>
    %c0_2 = arith.constant 0 : index
    %c0_3 = arith.constant 0 : index
    %3 = vector.load %arg8[%c0_2, %c0_3] : memref<4x512xf32, #tpu.memory_space<vmem>>, vector<4x128xf32>
    tpu.vector_store %arg8[%c0_2, %c0_3], %2 {strides = array<i32>} : memref<4x512xf32, #tpu.memory_space<vmem>>, vector<4x128xf32>,
    %c0_4 = arith.constant 0 : index
    %c384 = arith.constant 384 : index
    %4 = vector.load %arg8[%c0_4, %c384] : memref<4x512xf32, #tpu.memory_space<vmem>>, vector<4x128xf32>
    tpu.vector_store %arg8[%c0_4, %c384], %2 {strides = array<i32>} : memref<4x512xf32, #tpu.memory_space<vmem>>, vector<4x128xf32>,
    %cst_5 = arith.constant 0.000000e+00 : f32
    %5 = vector.broadcast %cst_5 : f32 to vector<4x128xf32>
    %c0_6 = arith.constant 0 : index
    %c0_7 = arith.constant 0 : index
    %6 = vector.load %arg9[%c0_6, %c0_7] : memref<4x512xf32, #tpu.memory_space<vmem>>, vector<4x128xf32>
    tpu.vector_store %arg9[%c0_6, %c0_7], %5 {strides = array<i32>} : memref<4x512xf32, #tpu.memory_space<vmem>>, vector<4x128xf32>,
    %c0_8 = arith.constant 0 : index
    %c384_9 = arith.constant 384 : index
    %7 = vector.load %arg9[%c0_8, %c384_9] : memref<4x512xf32, #tpu.memory_space<vmem>>, vector<4x128xf32>
    tpu.vector_store %arg9[%c0_8, %c384_9], %5 {strides = array<i32>} : memref<4x512xf32, #tpu.memory_space<vmem>>, vector<4x128xf32>,
    %c0_10 = arith.constant 0 : index
    %c0_11 = arith.constant 0 : index
    %c0_12 = arith.constant 0 : index
    %8 = vector.load %arg1[%c0_10, %c0_11, %c0_12] : memref<1x4x256xf32, #tpu.memory_space<vmem>>, vector<1x4x256xf32>
    %9 = vector.shape_cast %8 : vector<1x4x256xf32> to vector<4x256xf32>
    %c0_13 = arith.constant 0 : index
    %c128 = arith.constant 128 : index
    %10 = vector.load %arg8[%c0_13, %c128] : memref<4x512xf32, #tpu.memory_space<vmem>>, vector<4x256xf32>
    tpu.vector_store %arg8[%c0_13, %c128], %9 {strides = array<i32>} : memref<4x512xf32, #tpu.memory_space<vmem>>, vector<4x256xf32>,
    %c0_14 = arith.constant 0 : index
    %c111 = arith.constant 111 : index
    %11 = vector.load %arg8[%c0_14, %c111] : memref<4x512xf32, #tpu.memory_space<vmem>>, vector<4x256xf32>
    %12 = vector.broadcast %0 : vector<1x256xf32> to vector<4x256xf32>
    %13 = arith.mulf %11, %12 : vector<4x256xf32>
    %c0_15 = arith.constant 0 : index
    %c0_16 = arith.constant 0 : index
    %14 = vector.load %arg10[%c0_15, %c0_16] : memref<36x256xf32, #tpu.memory_space<vmem>>, vector<4x256xf32>
    tpu.vector_store %arg10[%c0_15, %c0_16], %13 {strides = array<i32>} : memref<36x256xf32, #tpu.memory_space<vmem>>, vector<4x256xf32>,
    %c0_17 = arith.constant 0 : index
    %c112 = arith.constant 112 : index
    %15 = vector.load %arg8[%c0_17, %c112] : memref<4x512xf32, #tpu.memory_space<vmem>>, vector<4x256xf32>
    %c4 = arith.constant 4 : index
    %c0_18 = arith.constant 0 : index
    %16 = vector.load %arg10[%c4, %c0_18] : memref<36x256xf32, #tpu.memory_space<vmem>>, vector<4x256xf32>
    tpu.vector_store %arg10[%c4, %c0_18], %15 {strides = array<i32>} : memref<36x256xf32, #tpu.memory_space<vmem>>, vector<4x256xf32>,
    %c0_19 = arith.constant 0 : index
    %c113 = arith.constant 113 : index
    %17 = vector.load %arg8[%c0_19, %c113] : memref<4x512xf32, #tpu.memory_space<vmem>>, vector<4x256xf32>
    %18 = vector.broadcast %1 : vector<1x256xf32> to vector<4x256xf32>
    %19 = arith.mulf %17, %18 : vector<4x256xf32>
    %c8 = arith.constant 8 : index
    %c0_20 = arith.constant 0 : index
    %20 = vector.load %arg10[%c8, %c0_20] : memref<36x256xf32, #tpu.memory_space<vmem>>, vector<4x256xf32>
    tpu.vector_store %arg10[%c8, %c0_20], %19 {strides = array<i32>} : memref<36x256xf32, #tpu.memory_space<vmem>>, vector<4x256xf32>,
    %c0_21 = arith.constant 0 : index
    %c127 = arith.constant 127 : index
    %21 = vector.load %arg8[%c0_21, %c127] : memref<4x512xf32, #tpu.memory_space<vmem>>, vector<4x256xf32>
    %22 = vector.broadcast %0 : vector<1x256xf32> to vector<4x256xf32>
    %23 = arith.mulf %21, %22 : vector<4x256xf32>
    %c12 = arith.constant 12 : index
    %c0_22 = arith.constant 0 : index
    %24 = vector.load %arg10[%c12, %c0_22] : memref<36x256xf32, #tpu.memory_space<vmem>>, vector<4x256xf32>
    tpu.vector_store %arg10[%c12, %c0_22], %23 {strides = array<i32>} : memref<36x256xf32, #tpu.memory_space<vmem>>, vector<4x256xf32>,
    %c0_23 = arith.constant 0 : index
    %c128_24 = arith.constant 128 : index
    %25 = vector.load %arg8[%c0_23, %c128_24] : memref<4x512xf32, #tpu.memory_space<vmem>>, vector<4x256xf32>
    %c16 = arith.constant 16 : index
    %c0_25 = arith.constant 0 : index
    %26 = vector.load %arg10[%c16, %c0_25] : memref<36x256xf32, #tpu.memory_space<vmem>>, vector<4x256xf32>
    tpu.vector_store %arg10[%c16, %c0_25], %25 {strides = array<i32>} : memref<36x256xf32, #tpu.memory_space<vmem>>, vector<4x256xf32>,
    %c0_26 = arith.constant 0 : index
    %c129 = arith.constant 129 : index
    %27 = vector.load %arg8[%c0_26, %c129] : memref<4x512xf32, #tpu.memory_space<vmem>>, vector<4x256xf32>
    %28 = vector.broadcast %1 : vector<1x256xf32> to vector<4x256xf32>
    %29 = arith.mulf %27, %28 : vector<4x256xf32>
    %c20 = arith.constant 20 : index
    %c0_27 = arith.constant 0 : index
    %30 = vector.load %arg10[%c20, %c0_27] : memref<36x256xf32, #tpu.memory_space<vmem>>, vector<4x256xf32>
    tpu.vector_store %arg10[%c20, %c0_27], %29 {strides = array<i32>} : memref<36x256xf32, #tpu.memory_space<vmem>>, vector<4x256xf32>,
    %c0_28 = arith.constant 0 : index
    %c143 = arith.constant 143 : index
    %31 = vector.load %arg8[%c0_28, %c143] : memref<4x512xf32, #tpu.memory_space<vmem>>, vector<4x256xf32>
    %32 = vector.broadcast %0 : vector<1x256xf32> to vector<4x256xf32>
    %33 = arith.mulf %31, %32 : vector<4x256xf32>
    %c24 = arith.constant 24 : index
    %c0_29 = arith.constant 0 : index
    %34 = vector.load %arg10[%c24, %c0_29] : memref<36x256xf32, #tpu.memory_space<vmem>>, vector<4x256xf32>
    tpu.vector_store %arg10[%c24, %c0_29], %33 {strides = array<i32>} : memref<36x256xf32, #tpu.memory_space<vmem>>, vector<4x256xf32>,
    %c0_30 = arith.constant 0 : index
    %c144 = arith.constant 144 : index
    %35 = vector.load %arg8[%c0_30, %c144] : memref<4x512xf32, #tpu.memory_space<vmem>>, vector<4x256xf32>
    %c28 = arith.constant 28 : index
    %c0_31 = arith.constant 0 : index
    %36 = vector.load %arg10[%c28, %c0_31] : memref<36x256xf32, #tpu.memory_space<vmem>>, vector<4x256xf32>
    tpu.vector_store %arg10[%c28, %c0_31], %35 {strides = array<i32>} : memref<36x256xf32, #tpu.memory_space<vmem>>, vector<4x256xf32>,
    %c0_32 = arith.constant 0 : index
    %c145 = arith.constant 145 : index
    %37 = vector.load %arg8[%c0_32, %c145] : memref<4x512xf32, #tpu.memory_space<vmem>>, vector<4x256xf32>
    %38 = vector.broadcast %1 : vector<1x256xf32> to vector<4x256xf32>
    %39 = arith.mulf %37, %38 : vector<4x256xf32>
    %c32 = arith.constant 32 : index
    %c0_33 = arith.constant 0 : index
    %40 = vector.load %arg10[%c32, %c0_33] : memref<36x256xf32, #tpu.memory_space<vmem>>, vector<4x256xf32>
    tpu.vector_store %arg10[%c32, %c0_33], %39 {strides = array<i32>} : memref<36x256xf32, #tpu.memory_space<vmem>>, vector<4x256xf32>,
    %c0_34 = arith.constant 0 : index
    %c0_35 = arith.constant 0 : index
    %41 = vector.load %arg3[%c0_34, %c0_35] : memref<4x36xf32, #tpu.memory_space<vmem>>, vector<4x36xf32>
    %c0_36 = arith.constant 0 : index
    %c0_37 = arith.constant 0 : index
    %42 = vector.load %arg10[%c0_36, %c0_37] : memref<36x256xf32, #tpu.memory_space<vmem>>, vector<36x256xf32>
    %cst_38 = arith.constant dense<0.000000e+00> : vector<4x256xf32>
    %43 = tpu.matmul %41, %42, %cst_38 {dimension_numbers = #tpu.dot_dimension_numbers<[1], [0], [0], [1], [0, 0, 1, 1], [], []>} : vector<4x36xf32>, vector<36x256xf32>, vector<4x256xf32> -> vector<4x256xf32>
    %c0_39 = arith.constant 0 : index
    %c0_40 = arith.constant 0 : index
    %44 = vector.load %arg4[%c0_39, %c0_40] : memref<4x1xf32, #tpu.memory_space<vmem>>, vector<4x1xf32>
    %45 = vector.broadcast %44 : vector<4x1xf32> to vector<4x256xf32>
    %46 = arith.addf %43, %45 : vector<4x256xf32>
    %cst_41 = arith.constant 0.000000e+00 : f32
    %47 = vector.broadcast %cst_41 : f32 to vector<4x256xf32>
    %48 = arith.maximumf %46, %47 : vector<4x256xf32>
    %c0_42 = arith.constant 0 : index
    %c128_43 = arith.constant 128 : index
    %49 = vector.load %arg9[%c0_42, %c128_43] : memref<4x512xf32, #tpu.memory_space<vmem>>, vector<4x256xf32>
    tpu.vector_store %arg9[%c0_42, %c128_43], %48 {strides = array<i32>} : memref<4x512xf32, #tpu.memory_space<vmem>>, vector<4x256xf32>,
    %c0_44 = arith.constant 0 : index
    %c111_45 = arith.constant 111 : index
    %50 = vector.load %arg9[%c0_44, %c111_45] : memref<4x512xf32, #tpu.memory_space<vmem>>, vector<4x256xf32>
    %51 = vector.broadcast %0 : vector<1x256xf32> to vector<4x256xf32>
    %52 = arith.mulf %50, %51 : vector<4x256xf32>
    %c0_46 = arith.constant 0 : index
    %c0_47 = arith.constant 0 : index
    %53 = vector.load %arg10[%c0_46, %c0_47] : memref<36x256xf32, #tpu.memory_space<vmem>>, vector<4x256xf32>
    tpu.vector_store %arg10[%c0_46, %c0_47], %52 {strides = array<i32>} : memref<36x256xf32, #tpu.memory_space<vmem>>, vector<4x256xf32>,
    %c0_48 = arith.constant 0 : index
    %c112_49 = arith.constant 112 : index
    %54 = vector.load %arg9[%c0_48, %c112_49] : memref<4x512xf32, #tpu.memory_space<vmem>>, vector<4x256xf32>
    %c4_50 = arith.constant 4 : index
    %c0_51 = arith.constant 0 : index
    %55 = vector.load %arg10[%c4_50, %c0_51] : memref<36x256xf32, #tpu.memory_space<vmem>>, vector<4x256xf32>
    tpu.vector_store %arg10[%c4_50, %c0_51], %54 {strides = array<i32>} : memref<36x256xf32, #tpu.memory_space<vmem>>, vector<4x256xf32>,
    %c0_52 = arith.constant 0 : index
    %c113_53 = arith.constant 113 : index
    %56 = vector.load %arg9[%c0_52, %c113_53] : memref<4x512xf32, #tpu.memory_space<vmem>>, vector<4x256xf32>
    %57 = vector.broadcast %1 : vector<1x256xf32> to vector<4x256xf32>
    %58 = arith.mulf %56, %57 : vector<4x256xf32>
    %c8_54 = arith.constant 8 : index
    %c0_55 = arith.constant 0 : index
    %59 = vector.load %arg10[%c8_54, %c0_55] : memref<36x256xf32, #tpu.memory_space<vmem>>, vector<4x256xf32>
    tpu.vector_store %arg10[%c8_54, %c0_55], %58 {strides = array<i32>} : memref<36x256xf32, #tpu.memory_space<vmem>>, vector<4x256xf32>,
    %c0_56 = arith.constant 0 : index
    %c127_57 = arith.constant 127 : index
    %60 = vector.load %arg9[%c0_56, %c127_57] : memref<4x512xf32, #tpu.memory_space<vmem>>, vector<4x256xf32>
    %61 = vector.broadcast %0 : vector<1x256xf32> to vector<4x256xf32>
    %62 = arith.mulf %60, %61 : vector<4x256xf32>
    %c12_58 = arith.constant 12 : index
    %c0_59 = arith.constant 0 : index
    %63 = vector.load %arg10[%c12_58, %c0_59] : memref<36x256xf32, #tpu.memory_space<vmem>>, vector<4x256xf32>
    tpu.vector_store %arg10[%c12_58, %c0_59], %62 {strides = array<i32>} : memref<36x256xf32, #tpu.memory_space<vmem>>, vector<4x256xf32>,
    %c0_60 = arith.constant 0 : index
    %c128_61 = arith.constant 128 : index
    %64 = vector.load %arg9[%c0_60, %c128_61] : memref<4x512xf32, #tpu.memory_space<vmem>>, vector<4x256xf32>
    %c16_62 = arith.constant 16 : index
    %c0_63 = arith.constant 0 : index
    %65 = vector.load %arg10[%c16_62, %c0_63] : memref<36x256xf32, #tpu.memory_space<vmem>>, vector<4x256xf32>
    tpu.vector_store %arg10[%c16_62, %c0_63], %64 {strides = array<i32>} : memref<36x256xf32, #tpu.memory_space<vmem>>, vector<4x256xf32>,
    %c0_64 = arith.constant 0 : index
    %c129_65 = arith.constant 129 : index
    %66 = vector.load %arg9[%c0_64, %c129_65] : memref<4x512xf32, #tpu.memory_space<vmem>>, vector<4x256xf32>
    %67 = vector.broadcast %1 : vector<1x256xf32> to vector<4x256xf32>
    %68 = arith.mulf %66, %67 : vector<4x256xf32>
    %c20_66 = arith.constant 20 : index
    %c0_67 = arith.constant 0 : index
    %69 = vector.load %arg10[%c20_66, %c0_67] : memref<36x256xf32, #tpu.memory_space<vmem>>, vector<4x256xf32>
    tpu.vector_store %arg10[%c20_66, %c0_67], %68 {strides = array<i32>} : memref<36x256xf32, #tpu.memory_space<vmem>>, vector<4x256xf32>,
    %c0_68 = arith.constant 0 : index
    %c143_69 = arith.constant 143 : index
    %70 = vector.load %arg9[%c0_68, %c143_69] : memref<4x512xf32, #tpu.memory_space<vmem>>, vector<4x256xf32>
    %71 = vector.broadcast %0 : vector<1x256xf32> to vector<4x256xf32>
    %72 = arith.mulf %70, %71 : vector<4x256xf32>
    %c24_70 = arith.constant 24 : index
    %c0_71 = arith.constant 0 : index
    %73 = vector.load %arg10[%c24_70, %c0_71] : memref<36x256xf32, #tpu.memory_space<vmem>>, vector<4x256xf32>
    tpu.vector_store %arg10[%c24_70, %c0_71], %72 {strides = array<i32>} : memref<36x256xf32, #tpu.memory_space<vmem>>, vector<4x256xf32>,
    %c0_72 = arith.constant 0 : index
    %c144_73 = arith.constant 144 : index
    %74 = vector.load %arg9[%c0_72, %c144_73] : memref<4x512xf32, #tpu.memory_space<vmem>>, vector<4x256xf32>
    %c28_74 = arith.constant 28 : index
    %c0_75 = arith.constant 0 : index
    %75 = vector.load %arg10[%c28_74, %c0_75] : memref<36x256xf32, #tpu.memory_space<vmem>>, vector<4x256xf32>
    tpu.vector_store %arg10[%c28_74, %c0_75], %74 {strides = array<i32>} : memref<36x256xf32, #tpu.memory_space<vmem>>, vector<4x256xf32>,
    %c0_76 = arith.constant 0 : index
    %c145_77 = arith.constant 145 : index
    %76 = vector.load %arg9[%c0_76, %c145_77] : memref<4x512xf32, #tpu.memory_space<vmem>>, vector<4x256xf32>
    %77 = vector.broadcast %1 : vector<1x256xf32> to vector<4x256xf32>
    %78 = arith.mulf %76, %77 : vector<4x256xf32>
    %c32_78 = arith.constant 32 : index
    %c0_79 = arith.constant 0 : index
    %79 = vector.load %arg10[%c32_78, %c0_79] : memref<36x256xf32, #tpu.memory_space<vmem>>, vector<4x256xf32>
    tpu.vector_store %arg10[%c32_78, %c0_79], %78 {strides = array<i32>} : memref<36x256xf32, #tpu.memory_space<vmem>>, vector<4x256xf32>,
    %c0_80 = arith.constant 0 : index
    %c0_81 = arith.constant 0 : index
    %80 = vector.load %arg5[%c0_80, %c0_81] : memref<4x36xf32, #tpu.memory_space<vmem>>, vector<4x36xf32>
    %c0_82 = arith.constant 0 : index
    %c0_83 = arith.constant 0 : index
    %81 = vector.load %arg10[%c0_82, %c0_83] : memref<36x256xf32, #tpu.memory_space<vmem>>, vector<36x256xf32>
    %cst_84 = arith.constant dense<0.000000e+00> : vector<4x256xf32>
    %82 = tpu.matmul %80, %81, %cst_84 {dimension_numbers = #tpu.dot_dimension_numbers<[1], [0], [0], [1], [0, 0, 1, 1], [], []>} : vector<4x36xf32>, vector<36x256xf32>, vector<4x256xf32> -> vector<4x256xf32>
    %c0_85 = arith.constant 0 : index
    %c0_86 = arith.constant 0 : index
    %83 = vector.load %arg6[%c0_85, %c0_86] : memref<4x1xf32, #tpu.memory_space<vmem>>, vector<4x1xf32>
    %84 = vector.broadcast %83 : vector<4x1xf32> to vector<4x256xf32>
    %85 = arith.addf %82, %84 : vector<4x256xf32>
    %c0_87 = arith.constant 0 : index
    %c0_88 = arith.constant 0 : index
    %c0_89 = arith.constant 0 : index
    %86 = vector.load %arg1[%c0_87, %c0_88, %c0_89] : memref<1x4x256xf32, #tpu.memory_space<vmem>>, vector<1x4x256xf32>
    %87 = vector.shape_cast %86 : vector<1x4x256xf32> to vector<4x256xf32>
    %88 = arith.addf %85, %87 : vector<4x256xf32>
    %cst_90 = arith.constant 0.000000e+00 : f32
    %89 = vector.broadcast %cst_90 : f32 to vector<4x256xf32>
    %90 = arith.maximumf %88, %89 : vector<4x256xf32>
    %c0_91 = arith.constant 0 : index
    %c0_92 = arith.constant 0 : index
    %c0_93 = arith.constant 0 : index
    %91 = vector.load %arg7[%c0_91, %c0_92, %c0_93] : memref<1x4x256xf32, #tpu.memory_space<vmem>>, vector<1x4x256xf32>
    %92 = vector.shape_cast %91 : vector<1x4x256xf32> to vector<4x256xf32>
    %93 = vector.shape_cast %90 : vector<4x256xf32> to vector<1x4x256xf32>
    tpu.vector_store %arg7[%c0_91, %c0_92, %c0_93], %93 {strides = array<i32>} : memref<1x4x256xf32, #tpu.memory_space<vmem>>, vector<1x4x256xf32>,
    return
  }
  func.func @transform_0(%arg0: i32) -> (i32, i32, i32) {
    %c0_i32 = arith.constant 0 : i32
    %c0_i32_0 = arith.constant 0 : i32
    %c0_i32_1 = arith.constant 0 : i32
    return %arg0, %c0_i32, %c0_i32_0 : i32, i32, i32
  }
  func.func @transform_1(%arg0: i32) -> (i32, i32) {
    %c0_i32 = arith.constant 0 : i32
    %c0_i32_0 = arith.constant 0 : i32
    %c0_i32_1 = arith.constant 0 : i32
    return %c0_i32, %c0_i32_0 : i32, i32
  }
  func.func @transform_2(%arg0: i32) -> (i32, i32) {
    %c0_i32 = arith.constant 0 : i32
    %c0_i32_0 = arith.constant 0 : i32
    %c0_i32_1 = arith.constant 0 : i32
    return %c0_i32, %c0_i32_0 : i32, i32
  }
  func.func @transform_3(%arg0: i32) -> (i32, i32) {
    %c0_i32 = arith.constant 0 : i32
    %c0_i32_0 = arith.constant 0 : i32
    %c0_i32_1 = arith.constant 0 : i32
    return %c0_i32, %c0_i32_0 : i32, i32
  }
  func.func @transform_4(%arg0: i32) -> (i32, i32) {
    %c0_i32 = arith.constant 0 : i32
    %c0_i32_0 = arith.constant 0 : i32
    %c0_i32_1 = arith.constant 0 : i32
    return %c0_i32, %c0_i32_0 : i32, i32
  }
  func.func @transform_5(%arg0: i32) -> (i32, i32) {
    %c0_i32 = arith.constant 0 : i32
    %c0_i32_0 = arith.constant 0 : i32
    %c0_i32_1 = arith.constant 0 : i32
    return %c0_i32, %c0_i32_0 : i32, i32
  }
  func.func @transform_6(%arg0: i32) -> (i32, i32, i32) {
    %c0_i32 = arith.constant 0 : i32
    %c0_i32_0 = arith.constant 0 : i32
    %c0_i32_1 = arith.constant 0 : i32
    return %arg0, %c0_i32, %c0_i32_0 : i32, i32, i32
  }
}

</mosaic_0001>

<llo_original>
// kernel: basic_block_forward.1
$region0: #{basic_block_forward.1}
  #allocation0 [shape = 'u32[]', space=smem, size = 0x4, offset = 0x4, fixed_abs, tag = 'smem constant byte address 0x4 - core index']
  #allocation1 [shape = 'u32[144,128]{1,0:T(1,128)}', space=vmem, size = 0x12000, scoped, tag = 'internal scratch']
  #allocation2 [shape = 'f32[4,512]{1,0:T(4,128)}', space=vmem, size = 0x2000, scoped, tag = 'scratch operand']
  #allocation3 [shape = 'f32[4,512]{1,0:T(4,128)}', space=vmem, size = 0x2000, scoped, tag = 'scratch operand']
  #allocation4 [shape = 'f32[36,256]{1,0:T(8,128)}', space=vmem, size = 0xa000, scoped, tag = 'scratch operand']
  %s0 = inlined_call_operand.vmem [shape: f32[2,4,256], index: 0, kind: input, shape index: {}]
  %s1 = inlined_call_operand.vmem [shape: f32[2,256], index: 1, kind: input, shape index: {}]
  %s2 = inlined_call_operand.vmem [shape: f32[4,36], index: 2, kind: input, shape index: {}]
  %s3 = inlined_call_operand.vmem [shape: f32[4,1], index: 3, kind: input, shape index: {}]
  %s4 = inlined_call_operand.vmem [shape: f32[4,36], index: 4, kind: input, shape index: {}]
  %s5 = inlined_call_operand.vmem [shape: f32[4,1], index: 5, kind: input, shape index: {}]
  %s6 = inlined_call_operand.vmem [shape: f32[2,4,256], index: 6, kind: output, shape index: {}]
  %s7 = sld [smem:[#allocation0]]
  $region57: #{basic_block_forward.1} parent=0
    _
  %s9 = ssub.s32 1, %s7
  %s10 = scalar_select 0, %s9, %s7
  loop: start=0, step=1, limit=4
  $region2: #{basic_block_forward.1} parent=0 // loop_pre_header
    _
  $region3: #{basic_block_forward.1} parent=0 // loop_header
    %s12 = sphi 0, %s16
    %p13 = scmp.ge.s32.totalorder %s12, 4
    %s22 = sphi 0, %s24
    %s25 = sphi 0, %s22
    %s26 = sphi 0, %s25
    %s42 = sphi 0, %s26
    %s46 = sphi 0, %s46
    %s48 = sphi 0, %s46
    %s49 = sphi 0, %s48
    %s63 = sphi 0, %s49
    %s67 = sphi 0, %s67
    %s69 = sphi 0, %s67
    %s70 = sphi 0, %s69
    %s84 = sphi 0, %s70
    %s88 = sphi 0, %s88
    %s90 = sphi 0, %s88
    %s91 = sphi 0, %s90
    %s105 = sphi 0, %s91
    %s109 = sphi 0, %s109
    %s111 = sphi 0, %s109
    %s112 = sphi 0, %s111
    %s126 = sphi 0, %s112
    %s130 = sphi 0, %s130
    %s132 = sphi 0, %s130
    %s133 = sphi 0, %s132
    %s147 = sphi 0, %s133
    %s153 = sphi 0, %s155
    %s156 = sphi 0, %s153
    %s157 = sphi 0, %s156
    %s173 = sphi 0, %s157
  $region4: #{basic_block_forward.1} parent=0 // loop_header_branch
    %15 = sbr.rel (%p13) target = $region8
  $region5: #{basic_block_forward.1} parent=0 // loop_body
    %s17 = ssub.s32 %s12, 1
    %s18 = ssub.s32 %s12, 2
    %s19 = sadd.s32 %s12, 1
    %s20 = ssub.s32 %s12, %s19
    %p21 = scmp.eq.s32.totalorder %s20, 0
    %s23 = sadd.s32 %s22, 1
    %s24 = scalar_select %p21, %s22, %s23
    %p27 = pneg %p21
    %p28 = scmp.eq.s32.totalorder %s12, 1
    %p29 = por %p27, %p28
    %p30 = scmp.ne.s32.totalorder %s22, %s25
    %p31 = scmp.eq.s32.totalorder %s12, 0
    %p32 = por %p30, %p31
    %p33 = scmp.ne.s32.totalorder %s22, %s25
    %p34 = scmp.eq.s32.totalorder %s17, 1
    %p35 = por %p33, %p34
    %p36 = scmp.ne.s32.totalorder %s25, %s26
    %p37 = scmp.eq.s32.totalorder %s17, 0
    %p38 = por %p36, %p37
    %p39 = scmp.ne.s32.totalorder %s25, %s26
    %p40 = scmp.eq.s32.totalorder %s18, 1
    %p41 = por %p39, %p40
    %p43 = scmp.ne.s32.totalorder %s26, %s42
    %p44 = scmp.eq.s32.totalorder %s18, 0
    %p45 = por %p43, %p44
    %s47 = sadd.s32 %s46, 1
    %p50 = scmp.eq.s32.totalorder %s12, 1
    %p51 = scmp.ne.s32.totalorder %s46, %s48
    %p52 = scmp.eq.s32.totalorder %s12, 0
    %p53 = por %p51, %p52
    %p54 = scmp.ne.s32.totalorder %s46, %s48
    %p55 = scmp.eq.s32.totalorder %s17, 1
    %p56 = por %p54, %p55
    %p57 = scmp.ne.s32.totalorder %s48, %s49
    %p58 = scmp.eq.s32.totalorder %s17, 0
    %p59 = por %p57, %p58
    %p60 = scmp.ne.s32.totalorder %s48, %s49
    %p61 = scmp.eq.s32.totalorder %s18, 1
    %p62 = por %p60, %p61
    %p64 = scmp.ne.s32.totalorder %s49, %s63
    %p65 = scmp.eq.s32.totalorder %s18, 0
    %p66 = por %p64, %p65
    %s68 = sadd.s32 %s67, 1
    %p71 = scmp.eq.s32.totalorder %s12, 1
    %p72 = scmp.ne.s32.totalorder %s67, %s69
    %p73 = scmp.eq.s32.totalorder %s12, 0
    %p74 = por %p72, %p73
    %p75 = scmp.ne.s32.totalorder %s67, %s69
    %p76 = scmp.eq.s32.totalorder %s17, 1
    %p77 = por %p75, %p76
    %p78 = scmp.ne.s32.totalorder %s69, %s70
    %p79 = scmp.eq.s32.totalorder %s17, 0
    %p80 = por %p78, %p79
    %p81 = scmp.ne.s32.totalorder %s69, %s70
    %p82 = scmp.eq.s32.totalorder %s18, 1
    %p83 = por %p81, %p82
    %p85 = scmp.ne.s32.totalorder %s70, %s84
    %p86 = scmp.eq.s32.totalorder %s18, 0
    %p87 = por %p85, %p86
    %s89 = sadd.s32 %s88, 1
    %p92 = scmp.eq.s32.totalorder %s12, 1
    %p93 = scmp.ne.s32.totalorder %s88, %s90
    %p94 = scmp.eq.s32.totalorder %s12, 0
    %p95 = por %p93, %p94
    %p96 = scmp.ne.s32.totalorder %s88, %s90
    %p97 = scmp.eq.s32.totalorder %s17, 1
    %p98 = por %p96, %p97
    %p99 = scmp.ne.s32.totalorder %s90, %s91
    %p100 = scmp.eq.s32.totalorder %s17, 0
    %p101 = por %p99, %p100
    %p102 = scmp.ne.s32.totalorder %s90, %s91
    %p103 = scmp.eq.s32.totalorder %s18, 1
    %p104 = por %p102, %p103
    %p106 = scmp.ne.s32.totalorder %s91, %s105
    %p107 = scmp.eq.s32.totalorder %s18, 0
    %p108 = por %p106, %p107
    %s110 = sadd.s32 %s109, 1
    %p113 = scmp.eq.s32.totalorder %s12, 1
    %p114 = scmp.ne.s32.totalorder %s109, %s111
    %p115 = scmp.eq.s32.totalorder %s12, 0
    %p116 = por %p114, %p115
    %p117 = scmp.ne.s32.totalorder %s109, %s111
    %p118 = scmp.eq.s32.totalorder %s17, 1
    %p119 = por %p117, %p118
    %p120 = scmp.ne.s32.totalorder %s111, %s112
    %p121 = scmp.eq.s32.totalorder %s17, 0
    %p122 = por %p120, %p121
    %p123 = scmp.ne.s32.totalorder %s111, %s112
    %p124 = scmp.eq.s32.totalorder %s18, 1
    %p125 = por %p123, %p124
    %p127 = scmp.ne.s32.totalorder %s112, %s126
    %p128 = scmp.eq.s32.totalorder %s18, 0
    %p129 = por %p127, %p128
    %s131 = sadd.s32 %s130, 1
    %p134 = scmp.eq.s32.totalorder %s12, 1
    %p135 = scmp.ne.s32.totalorder %s130, %s132
    %p136 = scmp.eq.s32.totalorder %s12, 0
    %p137 = por %p135, %p136
    %p138 = scmp.ne.s32.totalorder %s130, %s132
    %p139 = scmp.eq.s32.totalorder %s17, 1
    %p140 = por %p138, %p139
    %p141 = scmp.ne.s32.totalorder %s132, %s133
    %p142 = scmp.eq.s32.totalorder %s17, 0
    %p143 = por %p141, %p142
    %p144 = scmp.ne.s32.totalorder %s132, %s133
    %p145 = scmp.eq.s32.totalorder %s18, 1
    %p146 = por %p144, %p145
    %p148 = scmp.ne.s32.totalorder %s133, %s147
    %p149 = scmp.eq.s32.totalorder %s18, 0
    %p150 = por %p148, %p149
    %s151 = ssub.s32 %s12, %s19
    %p152 = scmp.eq.s32.totalorder %s151, 0
    %s154 = sadd.s32 %s153, 1
    %s155 = scalar_select %p152, %s153, %s154
    %p158 = pneg %p152
    %p159 = scmp.eq.s32.totalorder %s12, 1
    %p160 = por %p158, %p159
    %p161 = scmp.ne.s32.totalorder %s153, %s156
    %p162 = scmp.eq.s32.totalorder %s12, 0
    %p163 = por %p161, %p162
    %p164 = scmp.ne.s32.totalorder %s153, %s156
    %p165 = scmp.eq.s32.totalorder %s17, 1
    %p166 = por %p164, %p165
    %p167 = scmp.ne.s32.totalorder %s156, %s157
    %p168 = scmp.eq.s32.totalorder %s17, 0
    %p169 = por %p167, %p168
    %p170 = scmp.ne.s32.totalorder %s156, %s157
    %p171 = scmp.eq.s32.totalorder %s18, 1
    %p172 = por %p170, %p171
    %p174 = scmp.ne.s32.totalorder %s157, %s173
    %p175 = scmp.eq.s32.totalorder %s18, 0
    %p176 = por %p174, %p175
    %p177 = scmp.le.s32.totalorder 1, %s12
    %p178 = scmp.lt.s32.totalorder %s12, 3
    %p179 = pnand %p177, %p178
    %p180 = pneg %p179
    // Predicated region
    $region9: #{basic_block_forward.1} parent=5 // pred_check
      _
    $region10: #{basic_block_forward.1} parent=5 // pred_check_branch
      %182 = sbr.rel (%p179) target = $region12
    $region11: #{basic_block_forward.1} parent=5 // pred_region
      %s183 = ssub.s32 %s12, 1
      // Predicated region
      $region13: #{basic_block_forward.1} parent=11 // pred_check
        %p184 = pneg %p59
      $region14: #{basic_block_forward.1} parent=11 // pred_check_branch
        %186 = sbr.rel (%p184) target = $region16
      $region15: #{basic_block_forward.1} parent=11 // pred_region
        _
      $region16: #{basic_block_forward.1} parent=11 // pred_fallthru
        _
      // Predicated region
      $region17: #{basic_block_forward.1} parent=11 // pred_check
        %p187 = pneg %p80
      $region18: #{basic_block_forward.1} parent=11 // pred_check_branch
        %189 = sbr.rel (%p187) target = $region20
      $region19: #{basic_block_forward.1} parent=11 // pred_region
        _
      $region20: #{basic_block_forward.1} parent=11 // pred_fallthru
        _
      // Predicated region
      $region21: #{basic_block_forward.1} parent=11 // pred_check
        %p190 = pneg %p101
      $region22: #{basic_block_forward.1} parent=11 // pred_check_branch
        %192 = sbr.rel (%p190) target = $region24
      $region23: #{basic_block_forward.1} parent=11 // pred_region
        _
      $region24: #{basic_block_forward.1} parent=11 // pred_fallthru
        _
      // Predicated region
      $region25: #{basic_block_forward.1} parent=11 // pred_check
        %p193 = pneg %p122
      $region26: #{basic_block_forward.1} parent=11 // pred_check_branch
        %195 = sbr.rel (%p193) target = $region28
      $region27: #{basic_block_forward.1} parent=11 // pred_region
        _
      $region28: #{basic_block_forward.1} parent=11 // pred_fallthru
        _
      // Predicated region
      $region29: #{basic_block_forward.1} parent=11 // pred_check
        %p196 = pneg %p143
      $region30: #{basic_block_forward.1} parent=11 // pred_check_branch
        %198 = sbr.rel (%p196) target = $region32
      $region31: #{basic_block_forward.1} parent=11 // pred_region
        _
      $region32: #{basic_block_forward.1} parent=11 // pred_fallthru
        _
    $region12: #{basic_block_forward.1} parent=5 // pred_fallthru
      _
    %p199 = scmp.lt.s32.totalorder %s12, 2
    // Predicated region
    $region33: #{basic_block_forward.1} parent=5 // pred_check
      %p200 = pneg %p199
    $region34: #{basic_block_forward.1} parent=5 // pred_check_branch
      %202 = sbr.rel (%p200) target = $region36
    $region35: #{basic_block_forward.1} parent=5 // pred_region
      // Predicated region
      $region37: #{basic_block_forward.1} parent=35 // pred_check
        %p203 = pneg %p32
      $region38: #{basic_block_forward.1} parent=35 // pred_check_branch
        %205 = sbr.rel (%p203) target = $region40
      $region39: #{basic_block_forward.1} parent=35 // pred_region
        %p206 = scmp.lt.s32.totalorder %s12, 1
        %s207 = scalar_select %p206, %s12, 1
        %s208 = smul.addr %s207, 2
        %s209 = smul.addr %s208, 4
        %s210 = scalar_lea.vmem %s0, %s209
      $region40: #{basic_block_forward.1} parent=35 // pred_fallthru
        _
    $region36: #{basic_block_forward.1} parent=5 // pred_fallthru
      _
    %p211 = scmp.le.s32.totalorder 1, %s12
    %p212 = scmp.lt.s32.totalorder %s12, 3
    %p213 = pnand %p211, %p212
    %p214 = pneg %p213
    // Predicated region
    $region41: #{basic_block_forward.1} parent=5 // pred_check
      _
    $region42: #{basic_block_forward.1} parent=5 // pred_check_branch
      %216 = sbr.rel (%p213) target = $region44
    $region43: #{basic_block_forward.1} parent=5 // pred_region
      %s217 = ssub.s32 %s12, 1
      %p218 = scmp.lt.s32.totalorder %s17, 1
      %s219 = scalar_select %p218, %s17, 1
      %s220 = smul.addr %s219, 2
      %s221 = smul.addr %s220, 4
      %s222 = scalar_lea.vmem %s0, %s221
      %p223 = pneg %p38
      %p224 = pneg %p35
      %p225 = pneg %p59
      %p226 = pneg %p56
      %p227 = pneg %p80
      %p228 = pneg %p77
      %p229 = pneg %p101
      %p230 = pneg %p98
      %p231 = pneg %p122
      %p232 = pneg %p119
      %p233 = pneg %p143
      %p234 = pneg %p140
      %p235 = pneg %p169
      %p236 = pneg %p166
      %p237 = scmp.lt.s32.totalorder %s17, 1
      %s238 = scalar_select %p237, %s17, 1
      %s239 = smul.addr %s238, 2
      %s240 = smul.addr %s239, 4
      %s241 = scalar_lea.vmem %s6, %s240
      %p242 = scmp.lt.s32.totalorder %s17, 1
      %s243 = scalar_select %p242, %s17, 1
      %s244 = smul.addr %s243, 2
      %s245 = smul.addr %s244, 4
      %s246 = scalar_lea.vmem %s0, %s245
      %p247 = scmp.lt.s32.totalorder %s17, 1
      %s248 = scalar_select %p247, %s17, 1
      %s249 = smul.addr %s248, 2
      %s250 = smul.addr %s249, 4
      %s251 = scalar_lea.vmem %s6, %s250
      %v252 = vld [vmem:[%s1] ss:$2 sm:$0x3]
      %s253 = scalar_lea.vmem %s1, 1
      %v254 = vld [vmem:[%s253] ss:$2 sm:$0x3]
      %255 = vst [vmem:[#allocation2] sm:$0xf] 0.0
      %256 = vst [vmem:[#allocation2 + $0xc] sm:$0xf] 0.0
      %257 = vst [vmem:[#allocation3] sm:$0xf] 0.0
      %258 = vst [vmem:[#allocation3 + $0xc] sm:$0xf] 0.0
      %v259 = vld [vmem:[%s246] sm:$0xff]
      %260 = vst [vmem:[#allocation2 + $0x4] sm:$0xff] %v259
      %v261 = vld [vmem:[#allocation2] sm:$0xff]
      %v262 = vld [vmem:[#allocation2 + $0x8] sm:$0xf]
      %v264 = vlaneseq
      %v265 = vshrl.u32 %v264, 7
      %v266 = vsub.s32 0, %v265
      %v267 = vrot.slane %v252, %v266
      %v268 = vlaneseq
      %v269 = vshrl.u32 %v268, 7
      %v270 = vsub.s32 1, %v269
      %v271 = vrot.slane %v252, %v270
      %v272 = vcombine.low %v267, %v271
      %273 = vrot.lane.b32.xlu0 %v272, 111
      %v274 = vpop.permute.xlu0 %273
      %v275 = vrot.slane %v274, 4
      %vm276 = vcmask 908288
      %v277 = vsel %vm276, %v275, %v274
      %v280 = vmul.f32 %v261, %v277
      %v281 = vmul.f32 %v262, %v275
      %v284 = vcombine.high %v280, %v280
      %285 = vrot.lane.b32.xlu0 %v280, 17
      %v286 = vpop.permute.xlu0 %285
      %287 = vrot.lane.b32.xlu0 %v284, 17
      %v288 = vpop.permute.xlu0 %287
      %289 = vrot.lane.b32.xlu0 %v281, 17
      %v290 = vpop.permute.xlu0 %289
      %vm291 = vcmask 138240
      %v292 = vsel %vm291, %v286, %v288
      %v293 = vsel %vm291, %v288, %v290
      %296 = vst [vmem:[#allocation4] sm:$0xf] %v292
      %297 = vst [vmem:[#allocation4 + $0x8] sm:$0xf] %v293
      %v298 = vld [vmem:[#allocation2] sm:$0xff]
      %v299 = vld [vmem:[#allocation2 + $0x8] sm:$0xf]
      %v302 = vcombine.low %v298, %v298
      %v303 = vcombine.low %v299, %v299
      %304 = vrot.lane.b32.xlu0 %v302, 16
      %v305 = vpop.permute.xlu0 %304
      %306 = vrot.lane.b32.xlu0 %v298, 16
      %v307 = vpop.permute.xlu0 %306
      %308 = vrot.lane.b32.xlu0 %v303, 16
      %v309 = vpop.permute.xlu0 %308
      %vm310 = vcmask 130048
      %v311 = vsel %vm310, %v305, %v307
      %v312 = vsel %vm310, %v307, %v309
      %315 = vst [vmem:[#allocation4] sm:$0xf0] %v311
      %316 = vst [vmem:[#allocation4 + $0x8] sm:$0xf0] %v312
      %v317 = vld [vmem:[#allocation2] sm:$0xff]
      %v318 = vld [vmem:[#allocation2 + $0x8] sm:$0xf]
      %v320 = vlaneseq
      %v321 = vshrl.u32 %v320, 7
      %v322 = vsub.s32 0, %v321
      %v323 = vrot.slane %v254, %v322
      %v324 = vlaneseq
      %v325 = vshrl.u32 %v324, 7
      %v326 = vsub.s32 1, %v325
      %v327 = vrot.slane %v254, %v326
      %v328 = vcombine.low %v323, %v327
      %329 = vrot.lane.b32.xlu0 %v328, 113
      %v330 = vpop.permute.xlu0 %329
      %v331 = vrot.slane %v330, 4
      %vm332 = vcmask 924672
      %v333 = vsel %vm332, %v331, %v330
      %v336 = vmul.f32 %v317, %v333
      %v337 = vmul.f32 %v318, %v331
      %v340 = vcombine.high %v336, %v336
      %341 = vrot.lane.b32.xlu0 %v336, 15
      %v342 = vpop.permute.xlu0 %341
      %343 = vrot.lane.b32.xlu0 %v340, 15
      %v344 = vpop.permute.xlu0 %343
      %345 = vrot.lane.b32.xlu0 %v337, 15
      %v346 = vpop.permute.xlu0 %345
      %vm347 = vcmask 121856
      %v348 = vsel %vm347, %v342, %v344
      %v349 = vsel %vm347, %v344, %v346
      %352 = vst [vmem:[#allocation4 + $0x10] sm:$0xf] %v348
      %353 = vst [vmem:[#allocation4 + $0x18] sm:$0xf] %v349
      %v354 = vld [vmem:[#allocation2] sm:$0xff]
      %v355 = vld [vmem:[#allocation2 + $0x8] sm:$0xf]
      %356 = vrot.lane.b32.xlu0 %v272, 127
      %v357 = vpop.permute.xlu0 %356
      %v358 = vrot.slane %v357, 4
      %vm359 = vcmask 1039360
      %v360 = vsel %vm359, %v358, %v357
      %v363 = vmul.f32 %v354, %v360
      %v364 = vmul.f32 %v355, %v358
      %v367 = vcombine.low %v363, %v363
      %v368 = vcombine.low %v364, %v364
      %369 = vrot.lane.b32.xlu0 %v367, 1
      %v370 = vpop.permute.xlu0 %369
      %371 = vrot.lane.b32.xlu0 %v363, 1
      %v372 = vpop.permute.xlu0 %371
      %373 = vrot.lane.b32.xlu0 %v368, 1
      %v374 = vpop.permute.xlu0 %373
      %vm375 = vcmask 7168
      %v376 = vsel %vm375, %v370, %v372
      %v377 = vsel %vm375, %v372, %v374
      %380 = vst [vmem:[#allocation4 + $0x10] sm:$0xf0] %v376
      %381 = vst [vmem:[#allocation4 + $0x18] sm:$0xf0] %v377
      %v382 = vld [vmem:[#allocation2 + $0x4] sm:$0xff]
      %v384 = vcombine.high %v382, %v382
      %386 = vst [vmem:[#allocation4 + $0x20] sm:$0xf] %v382
      %387 = vst [vmem:[#allocation4 + $0x28] sm:$0xf] %v384
      %v388 = vld [vmem:[#allocation2 + $0x4] sm:$0xff]
      %v389 = vld [vmem:[#allocation2 + $0xc] sm:$0xf]
      %390 = vrot.lane.b32.xlu0 %v328, 1
      %v391 = vpop.permute.xlu0 %390
      %v392 = vrot.slane %v391, 4
      %v393 = vsel %vm375, %v392, %v391
      %v396 = vmul.f32 %v388, %v393
      %v397 = vmul.f32 %v389, %v392
      %v400 = vcombine.low %v396, %v396
      %v401 = vcombine.low %v397, %v397
      %402 = vrot.lane.b32.xlu0 %v400, 127
      %v403 = vpop.permute.xlu0 %402
      %404 = vrot.lane.b32.xlu0 %v396, 127
      %v405 = vpop.permute.xlu0 %404
      %406 = vrot.lane.b32.xlu0 %v401, 127
      %v407 = vpop.permute.xlu0 %406
      %v408 = vsel %vm359, %v403, %v405
      %v409 = vsel %vm359, %v405, %v407
      %412 = vst [vmem:[#allocation4 + $0x20] sm:$0xf0] %v408
      %413 = vst [vmem:[#allocation4 + $0x28] sm:$0xf0] %v409
      %v414 = vld [vmem:[#allocation2 + $0x4] sm:$0xff]
      %v415 = vld [vmem:[#allocation2 + $0xc] sm:$0xf]
      %416 = vrot.lane.b32.xlu0 %v272, 15
      %v417 = vpop.permute.xlu0 %416
      %v418 = vrot.slane %v417, 4
      %v419 = vsel %vm347, %v418, %v417
      %v422 = vmul.f32 %v414, %v419
      %v423 = vmul.f32 %v415, %v418
      %v426 = vcombine.high %v422, %v422
      %427 = vrot.lane.b32.xlu0 %v422, 113
      %v428 = vpop.permute.xlu0 %427
      %429 = vrot.lane.b32.xlu0 %v426, 113
      %v430 = vpop.permute.xlu0 %429
      %431 = vrot.lane.b32.xlu0 %v423, 113
      %v432 = vpop.permute.xlu0 %431
      %v433 = vsel %vm332, %v428, %v430
      %v434 = vsel %vm332, %v430, %v432
      %437 = vst [vmem:[#allocation4 + $0x30] sm:$0xf] %v433
      %438 = vst [vmem:[#allocation4 + $0x38] sm:$0xf] %v434
      %v439 = vld [vmem:[#allocation2 + $0x4] sm:$0xff]
      %v440 = vld [vmem:[#allocation2 + $0xc] sm:$0xf]
      %v443 = vcombine.low %v439, %v439
      %v444 = vcombine.low %v440, %v440
      %445 = vrot.lane.b32.xlu0 %v443, 112
      %v446 = vpop.permute.xlu0 %445
      %447 = vrot.lane.b32.xlu0 %v439, 112
      %v448 = vpop.permute.xlu0 %447
      %449 = vrot.lane.b32.xlu0 %v444, 112
      %v450 = vpop.permute.xlu0 %449
      %vm451 = vcmask 916480
      %v452 = vsel %vm451, %v446, %v448
      %v453 = vsel %vm451, %v448, %v450
      %456 = vst [vmem:[#allocation4 + $0x30] sm:$0xf0] %v452
      %457 = vst [vmem:[#allocation4 + $0x38] sm:$0xf0] %v453
      %v458 = vld [vmem:[#allocation2 + $0x4] sm:$0xff]
      %v459 = vld [vmem:[#allocation2 + $0xc] sm:$0xf]
      %460 = vrot.lane.b32.xlu0 %v328, 17
      %v461 = vpop.permute.xlu0 %460
      %v462 = vrot.slane %v461, 4
      %v463 = vsel %vm291, %v462, %v461
      %v466 = vmul.f32 %v458, %v463
      %v467 = vmul.f32 %v459, %v462
      %v470 = vcombine.high %v466, %v466
      %471 = vrot.lane.b32.xlu0 %v466, 111
      %v472 = vpop.permute.xlu0 %471
      %473 = vrot.lane.b32.xlu0 %v470, 111
      %v474 = vpop.permute.xlu0 %473
      %475 = vrot.lane.b32.xlu0 %v467, 111
      %v476 = vpop.permute.xlu0 %475
      %v477 = vsel %vm276, %v472, %v474
      %v478 = vsel %vm276, %v474, %v476
      %481 = vst [vmem:[#allocation4 + $0x40] sm:$0xf] %v477
      %482 = vst [vmem:[#allocation4 + $0x48] sm:$0xf] %v478
      %v483 = vld [vmem:[%s2] sm:$0xf]
      %v484 = vld [vmem:[#allocation4] sm:$0xff]
      %v485 = vld [vmem:[#allocation4 + $0x8] sm:$0xff]
      %v486 = vld [vmem:[#allocation4 + $0x10] sm:$0xff]
      %v487 = vld [vmem:[#allocation4 + $0x18] sm:$0xff]
      %v488 = vld [vmem:[#allocation4 + $0x20] sm:$0xff]
      %v489 = vld [vmem:[#allocation4 + $0x28] sm:$0xff]
      %v490 = vld [vmem:[#allocation4 + $0x30] sm:$0xff]
      %v491 = vld [vmem:[#allocation4 + $0x38] sm:$0xff]
      %v492 = vld [vmem:[#allocation4 + $0x40] sm:$0xf]
      %v493 = vld [vmem:[#allocation4 + $0x48] sm:$0xf]
      %v494 = vld [vmem:[%s3] sm:$0xf]
      %496 = vset.pattern.permute.xlu0 0
      %497 = vperm.xlu0 %496, %v494
      %v498 = vpop.permute.xlu0 %497
      %vm500 = vcmask 293888
      %v502 = vsel %vm500, %v483, 0
      %vm504 = vcmask 1043456
      %v506 = vsel %vm504, %v492, 0
      %v509 = vsel %vm504, %v493, 0
      %511 = vmatprep.subr.mxu0 %v485
      %512 = vmatpush1.msra.mxu0 %v484
      %513 = vmatprep.subr.mxu0 %v487
      %514 = vmatpush1.msra.mxu0 %v486
      %515 = vmatprep.subr.mxu0 %v489
      %516 = vmatpush1.msra.mxu0 %v488
      %517 = vmatprep.subr.mxu0 %v491
      %518 = vmatpush1.msra.mxu0 %v490
      %519 = vmatprep.subr.mxu0 %v509
      %520 = vmatpush1.msra.mxu0 %v506
      %521 = vmatprep.subr.mxu0 0.0
      %522 = vmatpush1.msra.mxu0 0.0
      %523 = vmatprep.subr.mxu0 0.0
      %524 = vmatpush1.msra.mxu0 0.0
      %525 = vmatprep.subr.mxu0 0.0
      %526 = vmatpush1.msra.mxu0 0.0
      %527 = vmatprep.subr.mxu0 0.0
      %528 = vmatpush1.msra.mxu0 0.0
      %529 = vmatprep.subr.mxu0 0.0
      %530 = vmatpush1.msra.mxu0 0.0
      %531 = vmatprep.subr.mxu0 0.0
      %532 = vmatpush1.msra.mxu0 0.0
      %533 = vmatprep.subr.mxu0 0.0
      %534 = vmatpush1.msra.mxu0 0.0
      %535 = vmatprep.subr.mxu0 0.0
      %536 = vmatpush1.msra.mxu0 0.0
      %537 = vmatprep.subr.mxu0 0.0
      %538 = vmatpush1.msra.mxu0 0.0
      %539 = vmatprep.subr.mxu0 0.0
      %540 = vmatpush1.msra.mxu0 0.0
      %541 = vmatprep.subr.mxu0 0.0
      %542 = vmatpush1.msra.mxu0 0.0
      %543 = vmatprep.subr.mxu0 0.0
      %544 = vmatpush1.msra.mxu0 0.0
      %545 = vmatprep.subr.mxu0 0.0
      %546 = vmatpush1.msra.mxu0 0.0
      %547 = vmatprep.subr.mxu0 0.0
      %548 = vmatpush1.msra.mxu0 0.0
      %549 = vmatprep.subr.mxu0 0.0
      %550 = vmatpush1.msra.mxu0 0.0
      %551 = vmatprep.subr.mxu0 0.0
      %552 = vmatpush1.msra.mxu0 0.0
      %553 = vmatprep.subr.mxu0 0.0
      %554 = vmatpush1.msra.mxu0 0.0
      %555 = vmatprep.subr.mxu0 0.0
      %556 = vmatpush1.msra.mxu0 0.0
      %557 = vmatprep.subr.mxu0 0.0
      %558 = vmatpush1.msra.mxu0 0.0
      %559 = vmatprep.subr.mxu0 0.0
      %560 = vmatpush1.msra.mxu0 0.0
      %561 = vmatprep.subr.mxu0 0.0
      %562 = vmatpush1.msra.mxu0 0.0
      %563 = vmatprep.subr.mxu0 0.0
      %564 = vmatpush1.msra.mxu0 0.0
      %565 = vmatprep.subr.mxu0 0.0
      %566 = vmatpush1.msra.mxu0 0.0
      %567 = vmatprep.subr.mxu0 0.0
      %568 = vmatpush1.msra.mxu0 0.0
      %569 = vmatprep.subr.mxu0 0.0
      %570 = vmatpush1.msra.mxu0 0.0
      %571 = vmatprep.subr.mxu0 0.0
      %572 = vmatpush1.msra.mxu0 0.0
      %573 = vmatprep.subr.mxu0 0.0
      %574 = vmatpush1.msra.mxu0 0.0
      %575 = vmatprep.mubr.f32.mxu0 0.0
      %576 = vmatmul.mubr.f32.gmra.mrb[0].mxu0 %v502
      %v577 = vpop.f32.mrb[0].mxu0
      %v578 = vadd.f32 %v498, %v577
      %v579 = vpop.f32.mrb[0].mxu0
      %v580 = vadd.f32 %v498, %v579
      %581 = vdwg.mxu0
      %v582 = vmax.f32 %v578, 0.0
      %v583 = vmax.f32 %v580, 0.0
      %v586 = vcombine.low %v582, %v583
      %588 = vst [vmem:[#allocation3 + $0x4] sm:$0xff] %v586
      %v589 = vld [vmem:[#allocation3] sm:$0xff]
      %v590 = vld [vmem:[#allocation3 + $0x8] sm:$0xf]
      %v591 = vmul.f32 %v589, %v277
      %v592 = vmul.f32 %v590, %v275
      %v595 = vcombine.high %v591, %v591
      %596 = vrot.lane.b32.xlu0 %v591, 17
      %v597 = vpop.permute.xlu0 %596
      %598 = vrot.lane.b32.xlu0 %v595, 17
      %v599 = vpop.permute.xlu0 %598
      %600 = vrot.lane.b32.xlu0 %v592, 17
      %v601 = vpop.permute.xlu0 %600
      %v602 = vsel %vm291, %v597, %v599
      %v603 = vsel %vm291, %v599, %v601
      %606 = vst [vmem:[#allocation4] sm:$0xf] %v602
      %607 = vst [vmem:[#allocation4 + $0x8] sm:$0xf] %v603
      %v608 = vld [vmem:[#allocation3] sm:$0xff]
      %v609 = vld [vmem:[#allocation3 + $0x8] sm:$0xf]
      %v612 = vcombine.low %v608, %v608
      %v613 = vcombine.low %v609, %v609
      %614 = vrot.lane.b32.xlu0 %v612, 16
      %v615 = vpop.permute.xlu0 %614
      %616 = vrot.lane.b32.xlu0 %v608, 16
      %v617 = vpop.permute.xlu0 %616
      %618 = vrot.lane.b32.xlu0 %v613, 16
      %v619 = vpop.permute.xlu0 %618
      %v620 = vsel %vm310, %v615, %v617
      %v621 = vsel %vm310, %v617, %v619
      %624 = vst [vmem:[#allocation4] sm:$0xf0] %v620
      %625 = vst [vmem:[#allocation4 + $0x8] sm:$0xf0] %v621
      %v626 = vld [vmem:[#allocation3] sm:$0xff]
      %v627 = vld [vmem:[#allocation3 + $0x8] sm:$0xf]
      %v628 = vmul.f32 %v626, %v333
      %v629 = vmul.f32 %v627, %v331
      %v632 = vcombine.high %v628, %v628
      %633 = vrot.lane.b32.xlu0 %v628, 15
      %v634 = vpop.permute.xlu0 %633
      %635 = vrot.lane.b32.xlu0 %v632, 15
      %v636 = vpop.permute.xlu0 %635
      %637 = vrot.lane.b32.xlu0 %v629, 15
      %v638 = vpop.permute.xlu0 %637
      %v639 = vsel %vm347, %v634, %v636
      %v640 = vsel %vm347, %v636, %v638
      %643 = vst [vmem:[#allocation4 + $0x10] sm:$0xf] %v639
      %644 = vst [vmem:[#allocation4 + $0x18] sm:$0xf] %v640
      %v645 = vld [vmem:[#allocation3] sm:$0xff]
      %v646 = vld [vmem:[#allocation3 + $0x8] sm:$0xf]
      %v647 = vmul.f32 %v645, %v360
      %v648 = vmul.f32 %v646, %v358
      %v651 = vcombine.low %v647, %v647
      %v652 = vcombine.low %v648, %v648
      %653 = vrot.lane.b32.xlu0 %v651, 1
      %v654 = vpop.permute.xlu0 %653
      %655 = vrot.lane.b32.xlu0 %v647, 1
      %v656 = vpop.permute.xlu0 %655
      %657 = vrot.lane.b32.xlu0 %v652, 1
      %v658 = vpop.permute.xlu0 %657
      %v659 = vsel %vm375, %v654, %v656
      %v660 = vsel %vm375, %v656, %v658
      %663 = vst [vmem:[#allocation4 + $0x10] sm:$0xf0] %v659
      %664 = vst [vmem:[#allocation4 + $0x18] sm:$0xf0] %v660
      %v665 = vld [vmem:[#allocation3 + $0x4] sm:$0xff]
      %v667 = vcombine.high %v665, %v665
      %669 = vst [vmem:[#allocation4 + $0x20] sm:$0xf] %v665
      %670 = vst [vmem:[#allocation4 + $0x28] sm:$0xf] %v667
      %v671 = vld [vmem:[#allocation3 + $0x4] sm:$0xff]
      %v672 = vld [vmem:[#allocation3 + $0xc] sm:$0xf]
      %v673 = vmul.f32 %v671, %v393
      %v674 = vmul.f32 %v672, %v392
      %v677 = vcombine.low %v673, %v673
      %v678 = vcombine.low %v674, %v674
      %679 = vrot.lane.b32.xlu0 %v677, 127
      %v680 = vpop.permute.xlu0 %679
      %681 = vrot.lane.b32.xlu0 %v673, 127
      %v682 = vpop.permute.xlu0 %681
      %683 = vrot.lane.b32.xlu0 %v678, 127
      %v684 = vpop.permute.xlu0 %683
      %v685 = vsel %vm359, %v680, %v682
      %v686 = vsel %vm359, %v682, %v684
      %689 = vst [vmem:[#allocation4 + $0x20] sm:$0xf0] %v685
      %690 = vst [vmem:[#allocation4 + $0x28] sm:$0xf0] %v686
      %v691 = vld [vmem:[#allocation3 + $0x4] sm:$0xff]
      %v692 = vld [vmem:[#allocation3 + $0xc] sm:$0xf]
      %v693 = vmul.f32 %v691, %v419
      %v694 = vmul.f32 %v692, %v418
      %v697 = vcombine.high %v693, %v693
      %698 = vrot.lane.b32.xlu0 %v693, 113
      %v699 = vpop.permute.xlu0 %698
      %700 = vrot.lane.b32.xlu0 %v697, 113
      %v701 = vpop.permute.xlu0 %700
      %702 = vrot.lane.b32.xlu0 %v694, 113
      %v703 = vpop.permute.xlu0 %702
      %v704 = vsel %vm332, %v699, %v701
      %v705 = vsel %vm332, %v701, %v703
      %708 = vst [vmem:[#allocation4 + $0x30] sm:$0xf] %v704
      %709 = vst [vmem:[#allocation4 + $0x38] sm:$0xf] %v705
      %v710 = vld [vmem:[#allocation3 + $0x4] sm:$0xff]
      %v711 = vld [vmem:[#allocation3 + $0xc] sm:$0xf]
      %v714 = vcombine.low %v710, %v710
      %v715 = vcombine.low %v711, %v711
      %716 = vrot.lane.b32.xlu0 %v714, 112
      %v717 = vpop.permute.xlu0 %716
      %718 = vrot.lane.b32.xlu0 %v710, 112
      %v719 = vpop.permute.xlu0 %718
      %720 = vrot.lane.b32.xlu0 %v715, 112
      %v721 = vpop.permute.xlu0 %720
      %v722 = vsel %vm451, %v717, %v719
      %v723 = vsel %vm451, %v719, %v721
      %726 = vst [vmem:[#allocation4 + $0x30] sm:$0xf0] %v722
      %727 = vst [vmem:[#allocation4 + $0x38] sm:$0xf0] %v723
      %v728 = vld [vmem:[#allocation3 + $0x4] sm:$0xff]
      %v729 = vld [vmem:[#allocation3 + $0xc] sm:$0xf]
      %v730 = vmul.f32 %v728, %v463
      %v731 = vmul.f32 %v729, %v462
      %v734 = vcombine.high %v730, %v730
      %735 = vrot.lane.b32.xlu0 %v730, 111
      %v736 = vpop.permute.xlu0 %735
      %737 = vrot.lane.b32.xlu0 %v734, 111
      %v738 = vpop.permute.xlu0 %737
      %739 = vrot.lane.b32.xlu0 %v731, 111
      %v740 = vpop.permute.xlu0 %739
      %v741 = vsel %vm276, %v736, %v738
      %v742 = vsel %vm276, %v738, %v740
      %745 = vst [vmem:[#allocation4 + $0x40] sm:$0xf] %v741
      %746 = vst [vmem:[#allocation4 + $0x48] sm:$0xf] %v742
      %v747 = vld [vmem:[%s4] sm:$0xf]
      %v748 = vld [vmem:[#allocation4] sm:$0xff]
      %v749 = vld [vmem:[#allocation4 + $0x8] sm:$0xff]
      %v750 = vld [vmem:[#allocation4 + $0x10] sm:$0xff]
      %v751 = vld [vmem:[#allocation4 + $0x18] sm:$0xff]
      %v752 = vld [vmem:[#allocation4 + $0x20] sm:$0xff]
      %v753 = vld [vmem:[#allocation4 + $0x28] sm:$0xff]
      %v754 = vld [vmem:[#allocation4 + $0x30] sm:$0xff]
      %v755 = vld [vmem:[#allocation4 + $0x38] sm:$0xff]
      %v756 = vld [vmem:[#allocation4 + $0x40] sm:$0xf]
      %v757 = vld [vmem:[#allocation4 + $0x48] sm:$0xf]
      %v758 = vld [vmem:[%s5] sm:$0xf]
      %760 = vset.pattern.permute.xlu0 0
      %761 = vperm.xlu0 %760, %v758
      %v762 = vpop.permute.xlu0 %761
      %v765 = vsel %vm500, %v747, 0
      %v768 = vsel %vm504, %v756, 0
      %v771 = vsel %vm504, %v757, 0
      %773 = vmatprep.subr.mxu0 %v749
      %774 = vmatpush1.msra.mxu0 %v748
      %775 = vmatprep.subr.mxu0 %v751
      %776 = vmatpush1.msra.mxu0 %v750
      %777 = vmatprep.subr.mxu0 %v753
      %778 = vmatpush1.msra.mxu0 %v752
      %779 = vmatprep.subr.mxu0 %v755
      %780 = vmatpush1.msra.mxu0 %v754
      %781 = vmatprep.subr.mxu0 %v771
      %782 = vmatpush1.msra.mxu0 %v768
      %783 = vmatprep.subr.mxu0 0.0
      %784 = vmatpush1.msra.mxu0 0.0
      %785 = vmatprep.subr.mxu0 0.0
      %786 = vmatpush1.msra.mxu0 0.0
      %787 = vmatprep.subr.mxu0 0.0
      %788 = vmatpush1.msra.mxu0 0.0
      %789 = vmatprep.subr.mxu0 0.0
      %790 = vmatpush1.msra.mxu0 0.0
      %791 = vmatprep.subr.mxu0 0.0
      %792 = vmatpush1.msra.mxu0 0.0
      %793 = vmatprep.subr.mxu0 0.0
      %794 = vmatpush1.msra.mxu0 0.0
      %795 = vmatprep.subr.mxu0 0.0
      %796 = vmatpush1.msra.mxu0 0.0
      %797 = vmatprep.subr.mxu0 0.0
      %798 = vmatpush1.msra.mxu0 0.0
      %799 = vmatprep.subr.mxu0 0.0
      %800 = vmatpush1.msra.mxu0 0.0
      %801 = vmatprep.subr.mxu0 0.0
      %802 = vmatpush1.msra.mxu0 0.0
      %803 = vmatprep.subr.mxu0 0.0
      %804 = vmatpush1.msra.mxu0 0.0
      %805 = vmatprep.subr.mxu0 0.0
      %806 = vmatpush1.msra.mxu0 0.0
      %807 = vmatprep.subr.mxu0 0.0
      %808 = vmatpush1.msra.mxu0 0.0
      %809 = vmatprep.subr.mxu0 0.0
      %810 = vmatpush1.msra.mxu0 0.0
      %811 = vmatprep.subr.mxu0 0.0
      %812 = vmatpush1.msra.mxu0 0.0
      %813 = vmatprep.subr.mxu0 0.0
      %814 = vmatpush1.msra.mxu0 0.0
      %815 = vmatprep.subr.mxu0 0.0
      %816 = vmatpush1.msra.mxu0 0.0
      %817 = vmatprep.subr.mxu0 0.0
      %818 = vmatpush1.msra.mxu0 0.0
      %819 = vmatprep.subr.mxu0 0.0
      %820 = vmatpush1.msra.mxu0 0.0
      %821 = vmatprep.subr.mxu0 0.0
      %822 = vmatpush1.msra.mxu0 0.0
      %823 = vmatprep.subr.mxu0 0.0
      %824 = vmatpush1.msra.mxu0 0.0
      %825 = vmatprep.subr.mxu0 0.0
      %826 = vmatpush1.msra.mxu0 0.0
      %827 = vmatprep.subr.mxu0 0.0
      %828 = vmatpush1.msra.mxu0 0.0
      %829 = vmatprep.subr.mxu0 0.0
      %830 = vmatpush1.msra.mxu0 0.0
      %831 = vmatprep.subr.mxu0 0.0
      %832 = vmatpush1.msra.mxu0 0.0
      %833 = vmatprep.subr.mxu0 0.0
      %834 = vmatpush1.msra.mxu0 0.0
      %835 = vmatprep.subr.mxu0 0.0
      %836 = vmatpush1.msra.mxu0 0.0
      %837 = vmatprep.mubr.f32.mxu0 0.0
      %838 = vmatmul.mubr.f32.gmra.mrb[0].mxu0 %v765
      %v839 = vpop.f32.mrb[0].mxu0
      %v840 = vadd.f32 %v762, %v839
      %v841 = vpop.f32.mrb[0].mxu0
      %v842 = vadd.f32 %v762, %v841
      %843 = vdwg.mxu0
      %v844 = vld [vmem:[%s246] sm:$0xff]
      %v846 = vcombine.high %v844, %v844
      %v848 = vadd.f32 %v840, %v844
      %v849 = vadd.f32 %v842, %v846
      %v850 = vmax.f32 %v848, 0.0
      %v851 = vmax.f32 %v849, 0.0
      %v854 = vcombine.low %v850, %v851
      %856 = vst [vmem:[%s251] sm:$0xff] %v854
      %p857 = scmp.lt.s32.totalorder %s17, 1
      %s858 = scalar_select %p857, %s17, 1
      %s859 = smul.addr %s858, 2
      %s860 = smul.addr %s859, 4
      %s861 = scalar_lea.vmem %s6, %s860
      // Predicated region
      $region45: #{basic_block_forward.1} parent=43 // pred_check
        %p862 = pneg %p166
      $region46: #{basic_block_forward.1} parent=43 // pred_check_branch
        %864 = sbr.rel (%p862) target = $region48
      $region47: #{basic_block_forward.1} parent=43 // pred_region
        _
      $region48: #{basic_block_forward.1} parent=43 // pred_fallthru
        _
    $region44: #{basic_block_forward.1} parent=5 // pred_fallthru
      _
    %p865 = scmp.le.s32.totalorder 2, %s12
    // Predicated region
    $region49: #{basic_block_forward.1} parent=5 // pred_check
      %p866 = pneg %p865
    $region50: #{basic_block_forward.1} parent=5 // pred_check_branch
      %868 = sbr.rel (%p866) target = $region52
    $region51: #{basic_block_forward.1} parent=5 // pred_region
      %s869 = ssub.s32 %s12, 2
      // Predicated region
      $region53: #{basic_block_forward.1} parent=51 // pred_check
        %p870 = pneg %p172
      $region54: #{basic_block_forward.1} parent=51 // pred_check_branch
        %872 = sbr.rel (%p870) target = $region56
      $region55: #{basic_block_forward.1} parent=51 // pred_region
        %p873 = scmp.lt.s32.totalorder %s18, 1
        %s874 = scalar_select %p873, %s18, 1
        %s875 = smul.addr %s874, 2
        %s876 = smul.addr %s875, 4
        %s877 = scalar_lea.vmem %s6, %s876
      $region56: #{basic_block_forward.1} parent=51 // pred_fallthru
        _
    $region52: #{basic_block_forward.1} parent=5 // pred_fallthru
      _
  $region6: #{basic_block_forward.1} parent=0 // loop_footer
    %s16 = sadd.s32 1, %s12
  $region7: #{basic_block_forward.1} parent=0 // loop_footer_branch
    %11 = sbr.rel target = $region3
  $region8: #{basic_block_forward.1} parent=0 // loop_exit
    _

</llo_original>
